<compile_context>
chip_gen: v5e
topology: v5e:2x2
jax: 0.10.0
libtpu: 0.0.40
codegen_flags: <defaults>
</compile_context>

<pallas_src>
import functools

import jax
import jax.numpy as jnp
from jax import lax
from jax.experimental import pallas as pl
from jax.experimental.pallas import tpu as pltpu


LANE = 128


# ----------------------------- Pallas kernels ------------------------------ #

def layernorm_kernel(x_ref, g_ref, b_ref, o_ref):
    """o = LayerNorm(x) with gamma g:(1,H), beta b:(1,H)."""
    x = x_ref[...]
    mu = jnp.mean(x, axis=-1, keepdims=True)
    var = jnp.mean((x - mu) ** 2, axis=-1, keepdims=True)
    o_ref[...] = (x - mu) * lax.rsqrt(var + 1e-12) * g_ref[...] + b_ref[...]


def attn_block_kernel(x_ref, mask_ref, wqkv_ref, bqkv_ref, wo_ref, bo_ref,
                      g_ref, beta_ref, o_ref, *, num_heads, head_dim, hidden):
    """Fused per-batch attention block: QKV proj + MHA + out proj + residual LN.

    Blocks: x/o (1,S,H) f32, mask (1,1,S) f32, wqkv (H,3H) bf16, wo (H,H) bf16,
            biases / LN params (1,*) f32.
    """
    x = x_ref[0]                                       # (S, H) f32
    S = x.shape[0]

    # Fused QKV projection (bf16 MXU inputs, f32 accumulation).
    qkv = jnp.dot(x.astype(jnp.bfloat16), wqkv_ref[...],
                  preferred_element_type=jnp.float32) + bqkv_ref[...]   # (S, 3H)

    def heads(t):                                      # (S, H) -> (nh, S, hd)
        return jnp.transpose(t.reshape(S, num_heads, head_dim), (1, 0, 2))

    qh = heads(qkv[:, :hidden]).astype(jnp.bfloat16)
    kh = heads(qkv[:, hidden:2 * hidden]).astype(jnp.bfloat16)
    vh = heads(qkv[:, 2 * hidden:]).astype(jnp.bfloat16)

    mask = mask_ref[0, 0]                              # (S,)
    bias = (1.0 - mask) * -10000.0                     # BERT-style additive mask
    scale = 1.0 / jnp.sqrt(jnp.float32(head_dim))

    # All heads in one batched contraction; contraction over head_dim (no explicit .T).
    s = jnp.einsum('nqd,nkd->nqk', qh, kh,
                   preferred_element_type=jnp.float32) * scale          # (nh, S, S)
    s = s + bias[None, None, :]
    m = jnp.max(s, axis=-1, keepdims=True)
    e = jnp.exp(s - m)
    p = e * pl.reciprocal(jnp.sum(e, axis=-1, keepdims=True), approx=True)

    ctx = jnp.einsum('nqk,nkd->nqd', p.astype(jnp.bfloat16), vh,
                     preferred_element_type=jnp.float32)                # (nh, S, hd)
    ctx = jnp.transpose(ctx, (1, 0, 2)).reshape(S, hidden)              # (S, H)

    attn_out = jnp.dot(ctx.astype(jnp.bfloat16), wo_ref[...],
                       preferred_element_type=jnp.float32) + bo_ref[...]

    # Residual + LayerNorm in f32; single store of the full (S, H) tile.
    r = x + attn_out
    mu = jnp.mean(r, axis=-1, keepdims=True)
    var = jnp.mean((r - mu) ** 2, axis=-1, keepdims=True)
    o_ref[0] = (r - mu) * lax.rsqrt(var + 1e-12) * g_ref[...] + beta_ref[...]


def ffn_block_kernel(x_ref, w1_ref, b1_ref, w2_ref, b2_ref, g_ref, beta_ref, o_ref):
    """Fused per-batch FFN block: w1 -> GELU -> w2 -> residual + LayerNorm."""
    x = x_ref[0]                                       # (S, H) f32
    h = jnp.dot(x.astype(jnp.bfloat16), w1_ref[...],
                preferred_element_type=jnp.float32) + b1_ref[...]
    # TODO(synk): BERT uses exact (erf) GELU; tanh approximation used here.
    h = jax.nn.gelu(h, approximate=True)
    y = jnp.dot(h.astype(jnp.bfloat16), w2_ref[...],
                preferred_element_type=jnp.float32) + b2_ref[...]
    r = x + y
    mu = jnp.mean(r, axis=-1, keepdims=True)
    var = jnp.mean((r - mu) ** 2, axis=-1, keepdims=True)
    o_ref[0] = (r - mu) * lax.rsqrt(var + 1e-12) * g_ref[...] + beta_ref[...]


def classifier_kernel(x_ref, w_ref, b_ref, o_ref):
    """o = x @ w + b with lane-padded (multiple of 128) output columns."""
    o_ref[...] = jnp.dot(x_ref[...].astype(jnp.bfloat16), w_ref[...],
                         preferred_element_type=jnp.float32) + b_ref[...]


# ----------------------------- kernel wrappers ------------------------------ #

def layernorm(x, gamma, beta):
    return pl.pallas_call(
        layernorm_kernel,
        out_shape=jax.ShapeDtypeStruct(x.shape, jnp.float32),
    )(x, gamma.reshape(1, -1), beta.reshape(1, -1))


def attention_block(x3, attention_mask, lp, num_heads):
    B, S, H = x3.shape
    head_dim = H // num_heads
    # Concatenate Q/K/V weights -> single (H, 3H) MXU matmul inside the kernel.
    wqkv = jnp.concatenate([lp["wq"], lp["wk"], lp["wv"]], axis=1).astype(jnp.bfloat16)
    bqkv = jnp.concatenate([lp["bq"], lp["bk"], lp["bv"]]).reshape(1, -1)
    rep = lambda b: (0, 0)   # weights resident across the batch grid
    return pl.pallas_call(
        functools.partial(attn_block_kernel, num_heads=num_heads,
                          head_dim=head_dim, hidden=H),
        out_shape=jax.ShapeDtypeStruct((B, S, H), jnp.float32),
        grid=(B,),
        in_specs=[
            pl.BlockSpec((1, S, H), lambda b: (b, 0, 0)),
            pl.BlockSpec((1, 1, S), lambda b: (b, 0, 0)),
            pl.BlockSpec((H, 3 * H), rep),
            pl.BlockSpec((1, 3 * H), rep),
            pl.BlockSpec((H, H), rep),
            pl.BlockSpec((1, H), rep),
            pl.BlockSpec((1, H), rep),
            pl.BlockSpec((1, H), rep),
        ],
        out_specs=pl.BlockSpec((1, S, H), lambda b: (b, 0, 0)),
        compiler_params=pltpu.CompilerParams(dimension_semantics=("parallel",)),
    )(x3, attention_mask.reshape(B, 1, S).astype(jnp.float32), wqkv, bqkv,
      lp["wo"].astype(jnp.bfloat16), lp["bo"].reshape(1, -1),
      lp["ln1_g"].reshape(1, -1), lp["ln1_b"].reshape(1, -1))


def ffn_block(x3, lp):
    B, S, H = x3.shape
    I = lp["w1"].shape[1]
    rep = lambda b: (0, 0)
    return pl.pallas_call(
        ffn_block_kernel,
        out_shape=jax.ShapeDtypeStruct((B, S, H), jnp.float32),
        grid=(B,),
        in_specs=[
            pl.BlockSpec((1, S, H), lambda b: (b, 0, 0)),
            pl.BlockSpec((H, I), rep),
            pl.BlockSpec((1, I), rep),
            pl.BlockSpec((I, H), rep),
            pl.BlockSpec((1, H), rep),
            pl.BlockSpec((1, H), rep),
            pl.BlockSpec((1, H), rep),
        ],
        out_specs=pl.BlockSpec((1, S, H), lambda b: (b, 0, 0)),
        compiler_params=pltpu.CompilerParams(dimension_semantics=("parallel",)),
    )(x3, lp["w1"].astype(jnp.bfloat16), lp["b1"].reshape(1, -1),
      lp["w2"].astype(jnp.bfloat16), lp["b2"].reshape(1, -1),
      lp["ln2_g"].reshape(1, -1), lp["ln2_b"].reshape(1, -1))


def trigger_classify(trig_repr, w, b):
    """(B, 2H) @ (2H, L) + b, with the label dim zero-padded to 128 lanes."""
    B, twoH = trig_repr.shape
    L = w.shape[1]
    Lp = max(LANE, ((L + LANE - 1) // LANE) * LANE)
    w_pad = jnp.zeros((twoH, Lp), jnp.bfloat16).at[:, :L].set(w.astype(jnp.bfloat16))
    b_pad = jnp.zeros((1, Lp), jnp.float32).at[:, :L].set(b.reshape(1, -1))
    out = pl.pallas_call(
        classifier_kernel,
        out_shape=jax.ShapeDtypeStruct((B, Lp), jnp.float32),
    )(trig_repr, w_pad, b_pad)
    return out[:, :L]


# ----------------------------- model (forward) ------------------------------ #

def hanet_trigger_encoder(params, input_ids, attention_mask, trigger_pos, *, num_heads):
    B, S = input_ids.shape
    H = params["word_emb"].shape[1]

    # Embedding-table lookup is plain-JAX glue; LayerNorm runs in a Pallas kernel.
    x = (params["word_emb"][input_ids]
         + params["pos_emb"][:S][None, :, :]
         + params["type_emb"][0][None, None, :]).astype(jnp.float32)
    x = layernorm(x.reshape(B * S, H), params["emb_ln_g"], params["emb_ln_b"])
    x = x.reshape(B, S, H)

    for lp in params["layers"]:
        x = attention_block(x, attention_mask, lp, num_heads)
        x = ffn_block(x, lp)

    hidden_states = x                                   # (B, S, H)

    # Trigger-span indices (same clamping semantics as torch.clamp) + row gather (glue).
    trig_start = jnp.clip(trigger_pos[:, 0], 0, S - 1).astype(jnp.int32)
    trig_end = jnp.clip(trigger_pos[:, 1] - 1, 0, S - 1).astype(jnp.int32)
    batch_idx = jnp.arange(B)
    start_emb = hidden_states[batch_idx, trig_start]    # (B, H)
    end_emb = hidden_states[batch_idx, trig_end]        # (B, H)
    trig_repr = jnp.concatenate([start_emb, end_emb], axis=-1)   # (B, 2H)

    return trigger_classify(trig_repr, params["cls_w"], params["cls_b"])


# ----------------------------- param init ---------------------------------- #

def init_params(key, *, vocab_size, max_pos, hidden, intermediate, num_layers, num_labels):
    std = 0.02
    n_keys = 4 + 6 * num_layers
    keys = iter(jax.random.split(key, n_keys))

    def nrm(shape):
        return jax.random.normal(next(keys), shape, jnp.float32) * std

    params = {
        "word_emb": nrm((vocab_size, hidden)),
        "pos_emb": nrm((max_pos, hidden)),
        "type_emb": nrm((2, hidden)),
        "emb_ln_g": jnp.ones((hidden,), jnp.float32),
        "emb_ln_b": jnp.zeros((hidden,), jnp.float32),
        "cls_w": nrm((2 * hidden, num_labels)),
        "cls_b": jnp.zeros((num_labels,), jnp.float32),
        "layers": [],
    }
    for _ in range(num_layers):
        lp = {
            "wq": nrm((hidden, hidden)), "bq": jnp.zeros((hidden,), jnp.float32),
            "wk": nrm((hidden, hidden)), "bk": jnp.zeros((hidden,), jnp.float32),
            "wv": nrm((hidden, hidden)), "bv": jnp.zeros((hidden,), jnp.float32),
            "wo": nrm((hidden, hidden)), "bo": jnp.zeros((hidden,), jnp.float32),
            "w1": nrm((hidden, intermediate)), "b1": jnp.zeros((intermediate,), jnp.float32),
            "w2": nrm((intermediate, hidden)), "b2": jnp.zeros((hidden,), jnp.float32),
            "ln1_g": jnp.ones((hidden,), jnp.float32), "ln1_b": jnp.zeros((hidden,), jnp.float32),
            "ln2_g": jnp.ones((hidden,), jnp.float32), "ln2_b": jnp.zeros((hidden,), jnp.float32),
        }
        params["layers"].append(lp)
    return params


# ----------------------------- main ----------------------------------------- #

if __name__ == "__main__":
    B, S, H = 2, 8, 32
    NUM_HEADS, INTER, LAYERS = 2, 64, 2
    VOCAB, NUM_LABELS = 50, 5

    key = jax.random.PRNGKey(0)
    kp, ki = jax.random.split(key)

    params = init_params(kp, vocab_size=VOCAB, max_pos=S, hidden=H,
                         intermediate=INTER, num_layers=LAYERS,
                         num_labels=NUM_LABELS)

    input_ids = jax.random.randint(ki, (B, S), 0, VOCAB, dtype=jnp.int32)
    attention_mask = jnp.array([[1, 1, 1, 1, 1, 1, 1, 1],
                                [1, 1, 1, 1, 1, 1, 0, 0]], dtype=jnp.int32)
    trigger_pos = jnp.array([[2, 4],
                             [5, 7]], dtype=jnp.int32)   # [B, 2] (start, end)

    logits = hanet_trigger_encoder(params, input_ids, attention_mask, trigger_pos,
                                   num_heads=NUM_HEADS)
    logits = jax.block_until_ready(logits)
    assert logits.shape == (B, NUM_LABELS) and logits.dtype == jnp.float32
    print("KERNEL_OK")
</pallas_src>

<mosaic_0001>
module attributes {stable_mosaic.version = 11 : i64} {
  func.func @layernorm_kernel(%arg0: memref<16x32xf32, #tpu.memory_space<vmem>>, %arg1: memref<1x32xf32, #tpu.memory_space<vmem>>, %arg2: memref<1x32xf32, #tpu.memory_space<vmem>>, %arg3: memref<16x32xf32, #tpu.memory_space<vmem>>) attributes {dimension_semantics = [], scalar_prefetch = 0 : i64, scratch_operands = 0 : i64, tpu.core_type = #tpu.core_type<tc>} {
    %c0 = arith.constant 0 : index
    %c0_0 = arith.constant 0 : index
    %0 = vector.load %arg0[%c0, %c0_0] : memref<16x32xf32, #tpu.memory_space<vmem>>, vector<16x32xf32>
    %cst = arith.constant dense<0.000000e+00> : vector<16xf32>
    %1 = vector.multi_reduction <add>, %0, %cst [1] : vector<16x32xf32> to vector<16xf32>
    %2 = vector.shape_cast %1 : vector<16xf32> to vector<16x1xf32>
    %cst_1 = arith.constant 3.200000e+01 : f32
    %3 = vector.broadcast %cst_1 : f32 to vector<16x1xf32>
    %4 = arith.divf %2, %3 : vector<16x1xf32>
    %5 = vector.broadcast %4 : vector<16x1xf32> to vector<16x32xf32>
    %6 = arith.subf %0, %5 : vector<16x32xf32>
    %7 = arith.mulf %6, %6 : vector<16x32xf32>
    %cst_2 = arith.constant dense<0.000000e+00> : vector<16xf32>
    %8 = vector.multi_reduction <add>, %7, %cst_2 [1] : vector<16x32xf32> to vector<16xf32>
    %9 = vector.shape_cast %8 : vector<16xf32> to vector<16x1xf32>
    %cst_3 = arith.constant 3.200000e+01 : f32
    %10 = vector.broadcast %cst_3 : f32 to vector<16x1xf32>
    %11 = arith.divf %9, %10 : vector<16x1xf32>
    %12 = vector.broadcast %4 : vector<16x1xf32> to vector<16x32xf32>
    %13 = arith.subf %0, %12 : vector<16x32xf32>
    %cst_4 = arith.constant 9.99999996E-13 : f32
    %14 = vector.broadcast %cst_4 : f32 to vector<16x1xf32>
    %15 = arith.addf %11, %14 : vector<16x1xf32>
    %16 = math.rsqrt %15 : vector<16x1xf32>
    %17 = vector.broadcast %16 : vector<16x1xf32> to vector<16x32xf32>
    %18 = arith.mulf %13, %17 : vector<16x32xf32>
    %c0_5 = arith.constant 0 : index
    %c0_6 = arith.constant 0 : index
    %19 = vector.load %arg1[%c0_5, %c0_6] : memref<1x32xf32, #tpu.memory_space<vmem>>, vector<1x32xf32>
    %20 = vector.broadcast %19 : vector<1x32xf32> to vector<16x32xf32>
    %21 = arith.mulf %18, %20 : vector<16x32xf32>
    %c0_7 = arith.constant 0 : index
    %c0_8 = arith.constant 0 : index
    %22 = vector.load %arg2[%c0_7, %c0_8] : memref<1x32xf32, #tpu.memory_space<vmem>>, vector<1x32xf32>
    %23 = vector.broadcast %22 : vector<1x32xf32> to vector<16x32xf32>
    %24 = arith.addf %21, %23 : vector<16x32xf32>
    %c0_9 = arith.constant 0 : index
    %c0_10 = arith.constant 0 : index
    %25 = vector.load %arg3[%c0_9, %c0_10] : memref<16x32xf32, #tpu.memory_space<vmem>>, vector<16x32xf32>
    tpu.vector_store %arg3[%c0_9, %c0_10], %24 {strides = array<i32>} : memref<16x32xf32, #tpu.memory_space<vmem>>, vector<16x32xf32>,
    return
  }
}

</mosaic_0001>

<llo_original>
// kernel: tpu_custom_call.1
$region0: #{tpu_custom_call.1}
  #allocation0 [shape = 'u32[]', space=smem, size = 0x4, offset = 0x4, fixed_abs, tag = 'smem constant byte address 0x4 - core index']
  #allocation1 [shape = 'u32[72,128]{1,0:T(1,128)}', space=vmem, size = 0x9000, scoped, tag = 'internal scratch']
  %s0 = inlined_call_operand.hbm [shape: f32[16,32], index: 0, kind: input, shape index: {}]
  %s1 = inlined_call_operand.hbm [shape: f32[1,32], index: 1, kind: input, shape index: {}]
  %s2 = inlined_call_operand.vmem [shape: f32[1,32], index: 2, kind: input, shape index: {}]
  %s3 = inlined_call_operand.hbm [shape: f32[16,32], index: 3, kind: output, shape index: {}]
  %s4 = sld [smem:[#allocation0]]
  $region30: #{tpu_custom_call.1} parent=0
    _
  %s6 = ssub.s32 1, %s4
  %s7 = scalar_select 0, %s6, %s4
  $region1: #{tpu_custom_call.1} parent=0
    #allocation2 [shape = 'u8[8192]{0}', space=vmem, size = 0x2000, scoped, tag = 'input window, operand 0, single buffered']
    #allocation3 [shape = 's32[1]{0}', space=sflag, size = 0x4, scoped, tag = 'scoped memory for tpu_custom_call.1']
    #allocation4 [shape = 's32[1]{0}', space=sflag, size = 0x4, scoped, tag = 'scoped memory for tpu_custom_call.1']
    #allocation5 [shape = 'u8[512]{0}', space=vmem, size = 0x400, scoped, tag = 'input window, operand 1, single buffered']
    #allocation6 [shape = 's32[1]{0}', space=sflag, size = 0x4, scoped, tag = 'scoped memory for tpu_custom_call.1']
    #allocation7 [shape = 'u8[8192]{0}', space=vmem, size = 0x2000, scoped, tag = 'output window, operand 0, single buffered']
    %8 = vsyncpa [#allocation3], 0
    %9 = vsyncpa [#allocation6], 0
    %10 = vsyncpa [#allocation4], 0
    // Predicated region
    $region2: #{tpu_custom_call.1} parent=1 // pred_check
      _
    $region3: #{tpu_custom_call.1} parent=1 // pred_check_branch
      %12 = sbr.rel (0) target = $region5
    $region4: #{tpu_custom_call.1} parent=1 // pred_region
      %14 = vsyncadd [#allocation3], 0
      %s15 = sshll.u32 %s0, 4
      %s16 = int_to_ptr.hbm [resolvable:$true] %s15
      %s17 = sshll.u32 [#allocation2], 4
      %s18 = int_to_ptr.vmem [resolvable:$true] %s17
      %23 = dma.hbm_to_vmem [thread:$0]  %s16, 256, %s18, [#allocation3], 128, 128, 8
    $region5: #{tpu_custom_call.1} parent=1 // pred_fallthru
      _
    // Predicated region
    $region6: #{tpu_custom_call.1} parent=1 // pred_check
      _
    $region7: #{tpu_custom_call.1} parent=1 // pred_check_branch
      %25 = sbr.rel (0) target = $region9
    $region8: #{tpu_custom_call.1} parent=1 // pred_region
      %27 = vsyncadd [#allocation6], 0
      %s29 = sshll.u32 %s1, 4
      %s30 = int_to_ptr.hbm [resolvable:$true] %s29
      %s31 = sshll.u32 [#allocation5], 4
      %s32 = int_to_ptr.vmem [resolvable:$true] %s31
      %34 = dma.hbm_to_vmem [thread:$0]  %s30, 16, %s32, [#allocation6]
    $region9: #{tpu_custom_call.1} parent=1 // pred_fallthru
      _
    // Predicated region
    $region10: #{tpu_custom_call.1} parent=1 // pred_check
      _
    $region11: #{tpu_custom_call.1} parent=1 // pred_check_branch
      %36 = sbr.rel (0) target = $region13
    $region12: #{tpu_custom_call.1} parent=1 // pred_region
      _
    $region13: #{tpu_custom_call.1} parent=1 // pred_fallthru
      _
    // Predicated region
    $region14: #{tpu_custom_call.1} parent=1 // pred_check
      _
    $region15: #{tpu_custom_call.1} parent=1 // pred_check_branch
      %38 = sbr.rel (0) target = $region17
    $region16: #{tpu_custom_call.1} parent=1 // pred_region
      %40 = dma.done [#allocation3], 256
    $region17: #{tpu_custom_call.1} parent=1 // pred_fallthru
      _
    // Predicated region
    $region18: #{tpu_custom_call.1} parent=1 // pred_check
      _
    $region19: #{tpu_custom_call.1} parent=1 // pred_check_branch
      %42 = sbr.rel (0) target = $region21
    $region20: #{tpu_custom_call.1} parent=1 // pred_region
      %44 = dma.done [#allocation6], 16
    $region21: #{tpu_custom_call.1} parent=1 // pred_fallthru
      _
    %v45 = vld [vmem:[#allocation2] sm:$0xff]
    %v46 = vld [vmem:[#allocation2 + $0x8] sm:$0xff]
    %vm47 = vcmask 261120
    %v48 = vsel %vm47, %v45, 0.0
    %49 = vadd.xlane.f32.xlu0 %v48
    %v50 = vpop.xlane.xlu0 %49
    %v51 = vsel %vm47, %v46, 0.0
    %52 = vadd.xlane.f32.xlu0 %v51
    %v53 = vpop.xlane.xlu0 %52
    %v54 = vrcp.pop 32.0
    %v55 = vmul.f32 32.0, %v54
    %v56 = vsub.f32 1.0, %v55
    %v57 = vmul.f32 %v54, %v56
    %v58 = vadd.f32 %v54, %v57
    %vm59 = vweird.f32 %v54
    %v60 = vsel %vm59, %v54, %v58
    %v61 = vmul.f32 %v50, %v60
    %v62 = vmul.f32 %v53, %v60
    %v63 = vsub.f32 %v45, %v61
    %v64 = vsub.f32 %v46, %v62
    %v65 = vmul.f32 %v63, %v63
    %v66 = vmul.f32 %v64, %v64
    %v67 = vsel %vm47, %v65, 0.0
    %68 = vadd.xlane.f32.xlu0 %v67
    %v69 = vpop.xlane.xlu0 %68
    %v70 = vsel %vm47, %v66, 0.0
    %71 = vadd.xlane.f32.xlu0 %v70
    %v72 = vpop.xlane.xlu0 %71
    %v73 = vmul.f32 %v69, %v60
    %v74 = vmul.f32 %v72, %v60
    %v75 = vadd.f32 %v73, 1e-12
    %v76 = vadd.f32 %v74, 1e-12
    %v77 = vrsqrt.pop %v75
    %v78 = vmul.f32 %v77, %v75
    %v79 = vmul.f32 %v78, %v77
    %v80 = vmul.f32 0.5, %v79
    %v81 = vsub.f32 1.5, %v80
    %v82 = vmul.f32 %v77, %v81
    %vm83 = vweird.f32 %v75
    %vm84 = vweird.f32 %v77
    %vm85 = vmor %vm83, %vm84
    %v86 = vsel %vm85, %v77, %v82
    %v87 = vrsqrt.pop %v76
    %v88 = vmul.f32 %v87, %v76
    %v89 = vmul.f32 %v88, %v87
    %v90 = vmul.f32 0.5, %v89
    %v91 = vsub.f32 1.5, %v90
    %v92 = vmul.f32 %v87, %v91
    %vm93 = vweird.f32 %v76
    %vm94 = vweird.f32 %v87
    %vm95 = vmor %vm93, %vm94
    %v96 = vsel %vm95, %v87, %v92
    %v97 = vmul.f32 %v63, %v86
    %v98 = vmul.f32 %v64, %v96
    %v99 = vld [vmem:[#allocation5] sm:$0x1]
    %v101 = vperm.slane %v99, 0
    %v103 = vmul.f32 %v97, %v101
    %v104 = vmul.f32 %v98, %v101
    %v105 = vld [vmem:[%s2] sm:$0x1]
    %v107 = vperm.slane %v105, 0
    %v109 = vadd.f32 %v103, %v107
    %v110 = vadd.f32 %v104, %v107
    %111 = vst.msk [vmem:[#allocation7] sm:$0xff] %vm47, %v109
    %112 = vst.msk [vmem:[#allocation7 + $0x8] sm:$0xff] %vm47, %v110
    // Predicated region
    $region22: #{tpu_custom_call.1} parent=1 // pred_check
      _
    $region23: #{tpu_custom_call.1} parent=1 // pred_check_branch
      %114 = sbr.rel (0) target = $region25
    $region24: #{tpu_custom_call.1} parent=1 // pred_region
      %116 = vsyncadd [#allocation4], 0
      %s117 = sshll.u32 [#allocation7], 4
      %s118 = int_to_ptr.vmem [resolvable:$true] %s117
      %s119 = sshll.u32 %s3, 4
      %s120 = int_to_ptr.hbm [resolvable:$true] %s119
      %125 = dma.vmem_to_hbm [thread:$0]  %s118, 256, %s120, [#allocation4], 128, 128, 8
    $region25: #{tpu_custom_call.1} parent=1 // pred_fallthru
      _
    // Predicated region
    $region26: #{tpu_custom_call.1} parent=1 // pred_check
      _
    $region27: #{tpu_custom_call.1} parent=1 // pred_check_branch
      %127 = sbr.rel (0) target = $region29
    $region28: #{tpu_custom_call.1} parent=1 // pred_region
      %129 = dma.done [#allocation4], 256
    $region29: #{tpu_custom_call.1} parent=1 // pred_fallthru
      _
    %130 = vsyncpa [#allocation3], 1
    %131 = vsyncpa [#allocation6], 1
    %132 = vsyncpa [#allocation4], 1

</llo_original>
